<compile_context>
chip_gen: v5e
topology: v5e:2x2
jax: 0.10.0
libtpu: 0.0.40
codegen_flags: <defaults>
</compile_context>

<pallas_src>
import functools

import jax
import jax.numpy as jnp
from jax.experimental import pallas as pl
from jax.experimental.pallas import tpu as pltpu

_IGNORE_INDEX = -100  # nn.CrossEntropyLoss default


# ----------------------------------------------------------------------------
# Kernel
# ----------------------------------------------------------------------------
def _ce_tile_kernel(logits_ref, labels_ref, out_ref, *, chunk_rows, num_chunks,
                    vocab, vocab_pad):
    """One grid step = one large row-tile, processed in fixed-size sub-chunks.

    logits_ref : (tile_rows, V)             native dtype, tile_rows = num_chunks*chunk_rows
    labels_ref : (1, num_chunks, chunk_rows) int32, lane-dense; padded rows = ignore_index
    out_ref    : (1, vocab_pad, V) float32  partial matrix; diag sums the tile's losses
    """
    # Hoisted once per tile (never re-materialized inside the loop).
    iota_v = jax.lax.broadcasted_iota(jnp.int32, (vocab_pad, 1), 0)  # (Vp, 1)

    def chunk_body(c, acc):
        r0 = pl.multiple_of(c * chunk_rows, chunk_rows)
        x = logits_ref[pl.ds(r0, chunk_rows), :].astype(jnp.float32)     # (CH, V)

        # Sanitize: out-of-bounds rows of a partial last tile read stale VMEM;
        # their one-hot columns are all-zero but 0 * inf = nan in the matmul,
        # so clamp to a finite range (finite logits are untouched).
        x = jnp.where(x > jnp.float32(-1e30), x, jnp.float32(-1e30))     # kills NaN, -inf
        x = jnp.where(x < jnp.float32(1e30), x, jnp.float32(1e30))       # kills +inf

        m = jnp.max(x, axis=-1, keepdims=True)                           # (CH, 1)
        s = jnp.sum(jnp.exp(x - m), axis=-1, keepdims=True)              # (CH, 1)
        y = (jnp.log(s) + m) - x                                         # (CH, V); y[r,j] = lse[r] - x[r,j]

        # Lane-dense labels for this chunk; ignore_index / padding never matches
        # any vocab id, so those columns of the one-hot are all zero.
        lab = labels_ref[0, pl.ds(c, 1), :]                              # (1, CH) int32
        onehot_t = (iota_v == lab).astype(jnp.float32)                   # (Vp, CH)

        # MXU gather:  diag(onehot_t @ y)[j] = sum over rows with label j of
        # their per-row cross-entropy loss.  f32 accumulate, high precision.
        return acc + jnp.dot(onehot_t, y,
                             preferred_element_type=jnp.float32,
                             precision=jax.lax.Precision.HIGHEST)        # (Vp, V)

    acc = jax.lax.fori_loop(
        0, num_chunks, chunk_body,
        jnp.zeros((vocab_pad, vocab), jnp.float32),
        unroll=2 if num_chunks >= 2 else 1)
    out_ref[0] = acc


# ----------------------------------------------------------------------------
# Wrapper
# ----------------------------------------------------------------------------
def _vmem_capacity_bytes() -> int:
    try:
        info = pltpu.get_tpu_info()
        cap = int(getattr(info, "vmem_capacity_bytes", 0) or 0)
        if cap > 0:
            return cap
    except Exception:
        pass
    return 64 << 20  # conservative (v7x per-core physical VMEM)


def _choose_tiling(n, v, itemsize, chunk_rows=None, block_rows=None):
    """Return (chunk_rows, chunks_per_tile, tile_rows, num_tiles).

    chunk_rows bounds the in-kernel vreg working set; tile_rows (the DMA block)
    is sized from a per-generation byte budget so grid-step overhead amortizes.
    tile_rows is always <= n (partial last tile handled via padded labels).
    """
    if chunk_rows is None:
        chunk_rows = 256
    chunk_rows = max(1, min(int(chunk_rows), n))
    if chunk_rows >= n or n < 8:
        # Single block covering the full row extent (block == array dim: always legal).
        return n, 1, n, 1
    chunk_rows = max(8, (chunk_rows // 8) * 8)

    if block_rows is None:
        cap = _vmem_capacity_bytes()
        # v5e/v6e have 128 MiB physical VMEM -> ~8 MiB logits blocks; v7x (64 MiB) -> ~4 MiB.
        budget = (8 << 20) if cap >= (96 << 20) else (4 << 20)
        block_rows = max(chunk_rows, budget // max(1, v * itemsize))
    chunks_per_tile = max(1, min(int(block_rows) // chunk_rows, n // chunk_rows))
    tile_rows = chunks_per_tile * chunk_rows
    num_tiles = pl.cdiv(n, tile_rows)
    return chunk_rows, chunks_per_tile, tile_rows, num_tiles


def cross_entropy_loss(logits: jax.Array, labels: jax.Array,
                       ignore_index: int = _IGNORE_INDEX, *,
                       chunk_rows: int | None = None,
                       block_rows: int | None = None) -> jax.Array:
    """Pallas equivalent of nn.CrossEntropyLoss()(logits, labels) (mean, ignore_index).

    logits: (N, V) float (bf16/f32), passed in native dtype, cast to f32 in-kernel.
    labels: (N,) int.  Returns a float32 scalar (NaN if every label is ignored,
    matching nn.CrossEntropyLoss).
    """
    n, v = logits.shape
    labels_flat = labels.reshape(-1).astype(jnp.int32)
    itemsize = jnp.dtype(logits.dtype).itemsize
    vocab_pad = ((v + 7) // 8) * 8  # keep the matmul M-dim / out block sublane-friendly

    ch, cpt, tile_rows, num_tiles = _choose_tiling(n, v, itemsize, chunk_rows, block_rows)

    # Lane-dense labels: (num_tiles, chunks_per_tile, chunk_rows).  Rows past N are
    # padded with ignore_index (all-zero one-hot columns -> zero contribution).
    n_padded = num_tiles * tile_rows
    if n_padded != n:
        labels_padded = jnp.full((n_padded,), ignore_index, jnp.int32).at[:n].set(labels_flat)
    else:
        labels_padded = labels_flat
    labels_3d = labels_padded.reshape(num_tiles, cpt, ch)

    kernel = functools.partial(_ce_tile_kernel, chunk_rows=ch, num_chunks=cpt,
                               vocab=v, vocab_pad=vocab_pad)

    # VMEM accounting: double-buffered inputs/outputs + in-kernel f32 temporaries.
    logits_block = tile_rows * v * itemsize
    labels_block = cpt * ch * 4
    out_block = vocab_pad * v * 4
    temps = 8 * ch * max(v, 128) * 4 + (2 << 20)
    cap = _vmem_capacity_bytes()
    vmem_limit = 2 * (logits_block + labels_block + out_block) + temps
    vmem_limit = int(max(16 << 20, min(vmem_limit, (3 * cap) // 4)))

    partials = pl.pallas_call(
        kernel,
        out_shape=jax.ShapeDtypeStruct((num_tiles, vocab_pad, v), jnp.float32),
        grid_spec=pltpu.PrefetchScalarGridSpec(
            num_scalar_prefetch=0,
            grid=(num_tiles,),
            in_specs=[
                pl.BlockSpec((tile_rows, v), lambda i: (i, 0)),
                pl.BlockSpec((1, cpt, ch), lambda i: (i, 0, 0)),
            ],
            out_specs=pl.BlockSpec((1, vocab_pad, v), lambda i: (i, 0, 0)),
        ),
        compiler_params=pltpu.CompilerParams(
            # Independent tiles -> megacore-shardable on v7x; no-op on 1-TC chips.
            dimension_semantics=("parallel",),
            vmem_limit_bytes=vmem_limit,
        ),
        cost_estimate=pl.CostEstimate(
            flops=int(n * v * (8 + 2 * vocab_pad)),
            transcendentals=int(n * v),
            bytes_accessed=int(n * v * itemsize + n_padded * 4
                               + num_tiles * vocab_pad * v * 4),
        ),
    )(logits, labels_3d)

    # Tiny finalize in plain JAX: trace of the summed partial matrices / #valid.
    loss_sum = jnp.trace(jnp.sum(partials, axis=0))
    valid_count = jnp.sum(labels_flat != ignore_index).astype(jnp.float32)
    # NaN when every label is ignore_index -- matches nn.CrossEntropyLoss.
    return loss_sum / valid_count


# ----------------------------------------------------------------------------
# Module mirror
# ----------------------------------------------------------------------------
class SmilesGLMConfig:
    def __init__(self, learning_rate: float, weight_decay: float, vocab_size: int):
        assert learning_rate > 0 and weight_decay >= 0.0 and vocab_size >= 1
        self.learning_rate = learning_rate
        self.weight_decay = weight_decay
        self.vocab_size = vocab_size


class SmilesGenerativeLanguageModelJAX:
    """JAX/Pallas mirror of the (abstract) PyTorch base class.

    Only `loss` / `training_step` have concrete semantics in the reference;
    those are backed by the Pallas cross-entropy kernel above.
    """

    def __init__(self, config: SmilesGLMConfig):
        self.config = config

    def init_state(self, inputs):
        # TODO(synk): abstract in the reference module (raises NotImplementedError).
        raise NotImplementedError()

    def forward(self, inputs, state=None):
        # TODO(synk): abstract in the reference module (raises NotImplementedError).
        raise NotImplementedError()

    def loss(self, y_hat: jax.Array, y: jax.Array) -> jax.Array:
        return cross_entropy_loss(y_hat, y)

    def training_step(self, preds: jax.Array, labels: jax.Array) -> jax.Array:
        # TODO(synk): the reference training_step calls self(batch) (abstract forward);
        # here precomputed predictions are passed in directly.
        preds = preds.reshape(-1, self.config.vocab_size)
        labels = labels.reshape(-1)
        return self.loss(preds, labels)


# ----------------------------------------------------------------------------
# Self-test
# ----------------------------------------------------------------------------
def _reference_ce(logits, labels, ignore_index=_IGNORE_INDEX):
    logits = logits.astype(jnp.float32)
    logp = jax.nn.log_softmax(logits, axis=-1)
    safe = jnp.where(labels == ignore_index, 0, labels).astype(jnp.int32)
    nll = -jnp.take_along_axis(logp, safe[:, None], axis=-1)[:, 0]
    valid = (labels != ignore_index).astype(jnp.float32)
    return jnp.sum(nll * valid) / jnp.sum(valid)


if __name__ == "__main__":
    key = jax.random.PRNGKey(0)
    k1, k2, k3, k4, k5, k6 = jax.random.split(key, 6)

    # --- Test 1: module-level training_step path (batch=2, seq=8, vocab=32) ---
    batch, seq, vocab_size = 2, 8, 32
    config = SmilesGLMConfig(learning_rate=1e-3, weight_decay=0.0, vocab_size=vocab_size)
    model = SmilesGenerativeLanguageModelJAX(config)
    preds = jax.random.normal(k1, (batch, seq, vocab_size), dtype=jnp.float32)
    labels = jax.random.randint(k2, (batch, seq), 0, vocab_size, dtype=jnp.int32)
    loss = jax.block_until_ready(model.training_step(preds, labels))
    ref = _reference_ce(preds.reshape(-1, vocab_size), labels.reshape(-1))
    assert jnp.allclose(loss, ref, atol=1e-2, rtol=1e-2), (loss, ref)

    # --- Test 2: multi-tile grid, partial last tile + ignore_index labels -----
    n2, v2 = 1000, 40
    logits2 = jax.random.normal(k3, (n2, v2), dtype=jnp.float32) * 3.0
    labels2 = jax.random.randint(k4, (n2,), 0, v2, dtype=jnp.int32)
    labels2 = labels2.at[::7].set(_IGNORE_INDEX)
    loss2 = jax.block_until_ready(
        cross_entropy_loss(logits2, labels2, chunk_rows=64, block_rows=256))
    ref2 = _reference_ce(logits2, labels2)
    assert jnp.allclose(loss2, ref2, atol=1e-2, rtol=1e-2), (loss2, ref2)

    # --- Test 3: bf16 logits through the default (large-tile) path ------------
    n3, v3 = 512, 32
    logits3 = jax.random.normal(k5, (n3, v3), dtype=jnp.bfloat16)
    labels3 = jax.random.randint(k6, (n3,), 0, v3, dtype=jnp.int32)
    loss3 = jax.block_until_ready(cross_entropy_loss(logits3, labels3))
    ref3 = _reference_ce(logits3.astype(jnp.float32), labels3)
    assert jnp.allclose(loss3, ref3, atol=1e-2, rtol=1e-2), (loss3, ref3)

    print("KERNEL_OK")
</pallas_src>

<mosaic_0001>
module attributes {stable_mosaic.version = 11 : i64} {
  func.func @_ce_tile_kernel(%arg0: i32, %arg1: memref<16x32xf32, #tpu.memory_space<vmem>>, %arg2: memref<1x1x16xi32, #tpu.memory_space<vmem>>, %arg3: memref<1x32x32xf32, #tpu.memory_space<vmem>>) attributes {dimension_semantics = [#tpu.dimension_semantics<parallel>], iteration_bounds = array<i64: 1>, scalar_prefetch = 0 : i64, scratch_operands = 0 : i64, tpu.core_type = #tpu.core_type<tc>, window_params = [{transform_indices = @transform_0, window_bounds = array<i64: 16, 32>}, {transform_indices = @transform_1, window_bounds = array<i64: 1, 1, 16>}, {transform_indices = @transform_2, window_bounds = array<i64: 1, 32, 32>}]} {
    %0 = tpu.iota {dimensions = array<i32: 0>} : vector<32x1xi32>
    %cst = arith.constant 0.000000e+00 : f32
    %1 = vector.broadcast %cst : f32 to vector<32x32xf32>
    %c0_i32 = arith.constant 0 : i32
    %c16_i32 = arith.constant 16 : i32
    %2 = arith.muli %c0_i32, %c16_i32 : i32
    %3 = tpu.assume_multiple %2, 16 : i32
    %4 = arith.index_cast %3 : i32 to index
    %c0 = arith.constant 0 : index
    %5 = vector.load %arg1[%4, %c0] : memref<16x32xf32, #tpu.memory_space<vmem>>, vector<16x32xf32>
    %cst_0 = arith.constant -1.000000e+30 : f32
    %6 = vector.broadcast %cst_0 : f32 to vector<16x32xf32>
    %7 = arith.cmpf ogt, %5, %6 : vector<16x32xf32>
    %cst_1 = arith.constant -1.000000e+30 : f32
    %8 = vector.broadcast %cst_1 : f32 to vector<16x32xf32>
    %9 = arith.select %7, %5, %8 : vector<16x32xi1>, vector<16x32xf32>
    %cst_2 = arith.constant 1.000000e+30 : f32
    %10 = vector.broadcast %cst_2 : f32 to vector<16x32xf32>
    %11 = arith.cmpf olt, %9, %10 : vector<16x32xf32>
    %cst_3 = arith.constant 1.000000e+30 : f32
    %12 = vector.broadcast %cst_3 : f32 to vector<16x32xf32>
    %13 = arith.select %11, %9, %12 : vector<16x32xi1>, vector<16x32xf32>
    %cst_4 = arith.constant dense<0xFF800000> : vector<16xf32>
    %14 = vector.multi_reduction <maximumf>, %13, %cst_4 [1] : vector<16x32xf32> to vector<16xf32>
    %15 = vector.shape_cast %14 : vector<16xf32> to vector<16x1xf32>
    %16 = vector.broadcast %15 : vector<16x1xf32> to vector<16x32xf32>
    %17 = arith.subf %13, %16 : vector<16x32xf32>
    %18 = math.exp %17 : vector<16x32xf32>
    %cst_5 = arith.constant dense<0.000000e+00> : vector<16xf32>
    %19 = vector.multi_reduction <add>, %18, %cst_5 [1] : vector<16x32xf32> to vector<16xf32>
    %20 = vector.shape_cast %19 : vector<16xf32> to vector<16x1xf32>
    %21 = math.log %20 : vector<16x1xf32>
    %22 = arith.addf %21, %15 : vector<16x1xf32>
    %23 = vector.broadcast %22 : vector<16x1xf32> to vector<16x32xf32>
    %24 = arith.subf %23, %13 : vector<16x32xf32>
    %c0_6 = arith.constant 0 : index
    %25 = arith.index_cast %c0_i32 : i32 to index
    %c0_7 = arith.constant 0 : index
    %26 = vector.load %arg2[%c0_6, %25, %c0_7] : memref<1x1x16xi32, #tpu.memory_space<vmem>>, vector<1x1x16xi32>
    %27 = vector.shape_cast %26 : vector<1x1x16xi32> to vector<1x16xi32>
    %28 = vector.broadcast %0 : vector<32x1xi32> to vector<32x16xi32>
    %29 = vector.broadcast %27 : vector<1x16xi32> to vector<32x16xi32>
    %30 = arith.cmpi eq, %28, %29 : vector<32x16xi32>
    %31 = arith.extui %30 : vector<32x16xi1> to vector<32x16xi32>
    %32 = arith.sitofp %31 : vector<32x16xi32> to vector<32x16xf32>
    %cst_8 = arith.constant dense<0.000000e+00> : vector<32x32xf32>
    %33 = tpu.matmul %32, %24, %cst_8 {dimension_numbers = #tpu.dot_dimension_numbers<[1], [0], [0], [1], [0, 0, 1, 1], [], []>, precision = #tpu.contract_precision<fp32>} : vector<32x16xf32>, vector<16x32xf32>, vector<32x32xf32> -> vector<32x32xf32>
    %34 = arith.addf %1, %33 : vector<32x32xf32>
    %c1_i32 = arith.constant 1 : i32
    %c0_9 = arith.constant 0 : index
    %c0_10 = arith.constant 0 : index
    %c0_11 = arith.constant 0 : index
    %35 = vector.load %arg3[%c0_9, %c0_10, %c0_11] : memref<1x32x32xf32, #tpu.memory_space<vmem>>, vector<1x32x32xf32>
    %36 = vector.shape_cast %35 : vector<1x32x32xf32> to vector<32x32xf32>
    %37 = vector.shape_cast %34 : vector<32x32xf32> to vector<1x32x32xf32>
    tpu.vector_store %arg3[%c0_9, %c0_10, %c0_11], %37 {strides = array<i32>} : memref<1x32x32xf32, #tpu.memory_space<vmem>>, vector<1x32x32xf32>,
    return
  }
  func.func @transform_0(%arg0: i32) -> (i32, i32) {
    %c0_i32 = arith.constant 0 : i32
    %c0_i32_0 = arith.constant 0 : i32
    return %arg0, %c0_i32 : i32, i32
  }
  func.func @transform_1(%arg0: i32) -> (i32, i32, i32) {
    %c0_i32 = arith.constant 0 : i32
    %c0_i32_0 = arith.constant 0 : i32
    %c0_i32_1 = arith.constant 0 : i32
    return %arg0, %c0_i32, %c0_i32_0 : i32, i32, i32
  }
  func.func @transform_2(%arg0: i32) -> (i32, i32, i32) {
    %c0_i32 = arith.constant 0 : i32
    %c0_i32_0 = arith.constant 0 : i32
    %c0_i32_1 = arith.constant 0 : i32
    return %arg0, %c0_i32, %c0_i32_0 : i32, i32, i32
  }
}

</mosaic_0001>

<llo_original>
// kernel: tpu_custom_call.1
$region0: #{tpu_custom_call.1}
  #allocation0 [shape = 'u32[]', space=smem, size = 0x4, offset = 0x4, fixed_abs, tag = 'smem constant byte address 0x4 - core index']
  #allocation1 [shape = 'u32[72,128]{1,0:T(1,128)}', space=vmem, size = 0x9000, scoped, tag = 'internal scratch']
  %s0 = inlined_call_operand.hbm [shape: f32[16,32], index: 0, kind: input, shape index: {}]
  %s1 = inlined_call_operand.hbm [shape: s32[1,1,16], index: 1, kind: input, shape index: {}]
  %s2 = inlined_call_operand.hbm [shape: f32[1,32,32], index: 2, kind: output, shape index: {}]
  %s3 = sld [smem:[#allocation0]]
  $region26: #{tpu_custom_call.1} parent=0
    _
  %s5 = ssub.s32 1, %s3
  %s6 = scalar_select 0, %s5, %s3
  $region1: #{tpu_custom_call.1} parent=0
    #allocation2 [shape = 'u8[8192]{0}', space=vmem, size = 0x2000, scoped, tag = 'input window, operand 0, single buffered']
    #allocation3 [shape = 's32[1]{0}', space=sflag, size = 0x4, scoped, tag = 'scoped memory for tpu_custom_call.1']
    #allocation4 [shape = 's32[1]{0}', space=sflag, size = 0x4, scoped, tag = 'scoped memory for tpu_custom_call.1']
    #allocation5 [shape = 'u8[512]{0}', space=vmem, size = 0x400, scoped, tag = 'input window, operand 1, single buffered']
    #allocation6 [shape = 's32[1]{0}', space=sflag, size = 0x4, scoped, tag = 'scoped memory for tpu_custom_call.1']
    #allocation7 [shape = 'u8[16384]{0}', space=vmem, size = 0x4000, scoped, tag = 'output window, operand 0, single buffered']
    %7 = vsyncpa [#allocation3], 0
    %8 = vsyncpa [#allocation6], 0
    %9 = vsyncpa [#allocation4], 0
    // Predicated region
    $region2: #{tpu_custom_call.1} parent=1 // pred_check
      _
    $region3: #{tpu_custom_call.1} parent=1 // pred_check_branch
      %11 = sbr.rel (0) target = $region5
    $region4: #{tpu_custom_call.1} parent=1 // pred_region
      %13 = vsyncadd [#allocation3], 0
      %s14 = sshll.u32 %s0, 4
      %s15 = int_to_ptr.hbm [resolvable:$true] %s14
      %s16 = sshll.u32 [#allocation2], 4
      %s17 = int_to_ptr.vmem [resolvable:$true] %s16
      %22 = dma.hbm_to_vmem [thread:$0]  %s15, 256, %s17, [#allocation3], 128, 128, 8
    $region5: #{tpu_custom_call.1} parent=1 // pred_fallthru
      _
    // Predicated region
    $region6: #{tpu_custom_call.1} parent=1 // pred_check
      _
    $region7: #{tpu_custom_call.1} parent=1 // pred_check_branch
      %24 = sbr.rel (0) target = $region9
    $region8: #{tpu_custom_call.1} parent=1 // pred_region
      %26 = vsyncadd [#allocation6], 0
      %s28 = sshll.u32 %s1, 4
      %s29 = int_to_ptr.hbm [resolvable:$true] %s28
      %s30 = sshll.u32 [#allocation5], 4
      %s31 = int_to_ptr.vmem [resolvable:$true] %s30
      %33 = dma.hbm_to_vmem [thread:$0]  %s29, 16, %s31, [#allocation6]
    $region9: #{tpu_custom_call.1} parent=1 // pred_fallthru
      _
    // Predicated region
    $region10: #{tpu_custom_call.1} parent=1 // pred_check
      _
    $region11: #{tpu_custom_call.1} parent=1 // pred_check_branch
      %35 = sbr.rel (0) target = $region13
    $region12: #{tpu_custom_call.1} parent=1 // pred_region
      %37 = dma.done [#allocation3], 256
    $region13: #{tpu_custom_call.1} parent=1 // pred_fallthru
      _
    // Predicated region
    $region14: #{tpu_custom_call.1} parent=1 // pred_check
      _
    $region15: #{tpu_custom_call.1} parent=1 // pred_check_branch
      %39 = sbr.rel (0) target = $region17
    $region16: #{tpu_custom_call.1} parent=1 // pred_region
      %41 = dma.done [#allocation6], 16
    $region17: #{tpu_custom_call.1} parent=1 // pred_fallthru
      _
    %v42 = vlaneseq
    %v43 = vshrl.u32 %v42, 7
    %v44 = vadd.s32 %v43, 8
    %v45 = vadd.s32 %v43, 16
    %v46 = vadd.s32 %v43, 24
    %v47 = vld [vmem:[#allocation2] sm:$0xff]
    %v48 = vld [vmem:[#allocation2 + $0x8] sm:$0xff]
    %vm49 = vcmp.gt.f32.partialorder %v47, -1e+30
    %vm50 = vcmp.gt.f32.partialorder %v48, -1e+30
    %v51 = vsel %vm49, %v47, -1e+30
    %v52 = vsel %vm50, %v48, -1e+30
    %vm53 = vcmp.lt.f32.partialorder %v51, 1e+30
    %vm54 = vcmp.lt.f32.partialorder %v52, 1e+30
    %v55 = vsel %vm53, %v51, 1e+30
    %v56 = vsel %vm54, %v52, 1e+30
    %vm57 = vcmask 261120
    %v58 = vsel %vm57, %v55, -inf
    %59 = vmax.xlane.f32.xlu0 %v58
    %v60 = vpop.xlane.xlu0 %59
    %v61 = vsel %vm57, %v56, -inf
    %62 = vmax.xlane.f32.xlu0 %v61
    %v63 = vpop.xlane.xlu0 %62
    %v64 = vsub.f32 %v55, %v60
    %v65 = vsub.f32 %v56, %v63
    %v66 = vmul.f32 %v64, 1.442695
    %v67 = vpow.pop %v66
    %v68 = vmul.f32 %v65, 1.442695
    %v69 = vpow.pop %v68
    %v70 = vsel %vm57, %v67, 0.0
    %71 = vadd.xlane.f32.xlu0 %v70
    %v72 = vpop.xlane.xlu0 %71
    %v73 = vsel %vm57, %v69, 0.0
    %74 = vadd.xlane.f32.xlu0 %v73
    %v75 = vpop.xlane.xlu0 %74
    %v76 = vlog2.pop %v72
    %v77 = vmul.f32 %v76, 0.6931472
    %v78 = vlog2.pop %v75
    %v79 = vmul.f32 %v78, 0.6931472
    %v80 = vadd.f32 %v77, %v60
    %v81 = vadd.f32 %v79, %v63
    %v82 = vsub.f32 %v80, %v55
    %v83 = vsub.f32 %v81, %v56
    %v84 = vld [vmem:[#allocation5] sm:$0x1]
    %v85 = vperm.slane %v84, 0
    %vm86 = vcmp.eq.s32.totalorder %v43, %v85
    %vm87 = vcmp.eq.s32.totalorder %v44, %v85
    %vm88 = vcmp.eq.s32.totalorder %v45, %v85
    %vm89 = vcmp.eq.s32.totalorder %v46, %v85
    %v90 = vsel %vm86, 1, 0
    %v91 = vsel %vm87, 1, 0
    %v92 = vsel %vm88, 1, 0
    %v93 = vsel %vm89, 1, 0
    %v94 = vcvt.s32.f32 %v90
    %v95 = vcvt.s32.f32 %v91
    %v96 = vcvt.s32.f32 %v92
    %v97 = vcvt.s32.f32 %v93
    %vm98 = vcmask 130048
    %v100 = vsel %vm98, %v94, 0
    %v103 = vsel %vm98, %v95, 0
    %v106 = vsel %vm98, %v96, 0
    %v109 = vsel %vm98, %v97, 0
    %111 = vmatpush.msra.mxu0 0.0
    %112 = vmatpush.msra.mxu0 0.0
    %113 = vmatpush.msra.mxu0 0.0
    %114 = vmatpush.msra.mxu0 0.0
    %115 = vmatpush.msra.mxu0 0.0
    %116 = vmatpush.msra.mxu0 0.0
    %117 = vmatpush.msra.mxu0 0.0
    %118 = vmatpush.msra.mxu0 0.0
    %119 = vmatpush.msra.mxu0 0.0
    %120 = vmatpush.msra.mxu0 0.0
    %121 = vmatpush.msra.mxu0 0.0
    %122 = vmatpush.msra.mxu0 0.0
    %123 = vmatpush.msra.mxu0 0.0
    %124 = vmatpush.msra.mxu0 0.0
    %v125 = vand.u32 %v83, 4294901760
    %126 = vmatpush.msra.mxu0 %v125
    %v127 = vand.u32 %v82, 4294901760
    %128 = vmatpush.msra.mxu0 %v127
    %v129 = vand.u32 %v100, 4294901760
    %v130 = vsub.f32 %v100, %v129
    %v131 = vand.u32 %v130, 4294901760
    %v132 = vsub.f32 %v130, %v131
    %v133 = vand.u32 %v132, 4294901760
    %134 = vmatmul.f32.gmra.mxu0 %v133
    %v135 = vpop.f32.mrf.mxu0
    %v136 = vadd.f32 0.0, %v135
    %v137 = vand.u32 %v103, 4294901760
    %v138 = vsub.f32 %v103, %v137
    %v139 = vand.u32 %v138, 4294901760
    %v140 = vsub.f32 %v138, %v139
    %v141 = vand.u32 %v140, 4294901760
    %142 = vmatmul.f32.gmra.mxu0 %v141
    %v143 = vpop.f32.mrf.mxu0
    %v144 = vadd.f32 0.0, %v143
    %v145 = vand.u32 %v106, 4294901760
    %v146 = vsub.f32 %v106, %v145
    %v147 = vand.u32 %v146, 4294901760
    %v148 = vsub.f32 %v146, %v147
    %v149 = vand.u32 %v148, 4294901760
    %150 = vmatmul.f32.gmra.mxu0 %v149
    %v151 = vpop.f32.mrf.mxu0
    %v152 = vadd.f32 0.0, %v151
    %v153 = vand.u32 %v109, 4294901760
    %v154 = vsub.f32 %v109, %v153
    %v155 = vand.u32 %v154, 4294901760
    %v156 = vsub.f32 %v154, %v155
    %v157 = vand.u32 %v156, 4294901760
    %158 = vmatmul.f32.gmra.mxu0 %v157
    %v159 = vpop.f32.mrf.mxu0
    %v160 = vadd.f32 0.0, %v159
    %161 = vdwg.mxu0
    %162 = vmatpush.msra.mxu0 0.0
    %163 = vmatpush.msra.mxu0 0.0
    %164 = vmatpush.msra.mxu0 0.0
    %165 = vmatpush.msra.mxu0 0.0
    %166 = vmatpush.msra.mxu0 0.0
    %167 = vmatpush.msra.mxu0 0.0
    %168 = vmatpush.msra.mxu0 0.0
    %169 = vmatpush.msra.mxu0 0.0
    %170 = vmatpush.msra.mxu0 0.0
    %171 = vmatpush.msra.mxu0 0.0
    %172 = vmatpush.msra.mxu0 0.0
    %173 = vmatpush.msra.mxu0 0.0
    %174 = vmatpush.msra.mxu0 0.0
    %175 = vmatpush.msra.mxu0 0.0
    %v176 = vand.u32 %v83, 4294901760
    %v177 = vsub.f32 %v83, %v176
    %v178 = vand.u32 %v177, 4294901760
    %v179 = vsub.f32 %v177, %v178
    %v180 = vand.u32 %v179, 4294901760
    %181 = vmatpush.msra.mxu0 %v180
    %v182 = vand.u32 %v82, 4294901760
    %v183 = vsub.f32 %v82, %v182
    %v184 = vand.u32 %v183, 4294901760
    %v185 = vsub.f32 %v183, %v184
    %v186 = vand.u32 %v185, 4294901760
    %187 = vmatpush.msra.mxu0 %v186
    %v188 = vand.u32 %v100, 4294901760
    %189 = vmatmul.f32.gmra.mxu0 %v188
    %v190 = vpop.f32.mrf.mxu0
    %v191 = vadd.f32 %v136, %v190
    %v192 = vand.u32 %v103, 4294901760
    %193 = vmatmul.f32.gmra.mxu0 %v192
    %v194 = vpop.f32.mrf.mxu0
    %v195 = vadd.f32 %v144, %v194
    %v196 = vand.u32 %v106, 4294901760
    %197 = vmatmul.f32.gmra.mxu0 %v196
    %v198 = vpop.f32.mrf.mxu0
    %v199 = vadd.f32 %v152, %v198
    %v200 = vand.u32 %v109, 4294901760
    %201 = vmatmul.f32.gmra.mxu0 %v200
    %v202 = vpop.f32.mrf.mxu0
    %v203 = vadd.f32 %v160, %v202
    %204 = vdwg.mxu0
    %205 = vmatpush.msra.mxu0 0.0
    %206 = vmatpush.msra.mxu0 0.0
    %207 = vmatpush.msra.mxu0 0.0
    %208 = vmatpush.msra.mxu0 0.0
    %209 = vmatpush.msra.mxu0 0.0
    %210 = vmatpush.msra.mxu0 0.0
    %211 = vmatpush.msra.mxu0 0.0
    %212 = vmatpush.msra.mxu0 0.0
    %213 = vmatpush.msra.mxu0 0.0
    %214 = vmatpush.msra.mxu0 0.0
    %215 = vmatpush.msra.mxu0 0.0
    %216 = vmatpush.msra.mxu0 0.0
    %217 = vmatpush.msra.mxu0 0.0
    %218 = vmatpush.msra.mxu0 0.0
    %v219 = vand.u32 %v83, 4294901760
    %v220 = vsub.f32 %v83, %v219
    %221 = vmatpush.msra.mxu0 %v220
    %v222 = vand.u32 %v82, 4294901760
    %v223 = vsub.f32 %v82, %v222
    %224 = vmatpush.msra.mxu0 %v223
    %v225 = vand.u32 %v100, 4294901760
    %v226 = vsub.f32 %v100, %v225
    %227 = vmatmul.f32.gmra.mxu0 %v226
    %v228 = vpop.f32.mrf.mxu0
    %v229 = vadd.f32 %v191, %v228
    %v230 = vand.u32 %v103, 4294901760
    %v231 = vsub.f32 %v103, %v230
    %232 = vmatmul.f32.gmra.mxu0 %v231
    %v233 = vpop.f32.mrf.mxu0
    %v234 = vadd.f32 %v195, %v233
    %v235 = vand.u32 %v106, 4294901760
    %v236 = vsub.f32 %v106, %v235
    %237 = vmatmul.f32.gmra.mxu0 %v236
    %v238 = vpop.f32.mrf.mxu0
    %v239 = vadd.f32 %v199, %v238
    %v240 = vand.u32 %v109, 4294901760
    %v241 = vsub.f32 %v109, %v240
    %242 = vmatmul.f32.gmra.mxu0 %v241
    %v243 = vpop.f32.mrf.mxu0
    %v244 = vadd.f32 %v203, %v243
    %245 = vdwg.mxu0
    %246 = vmatpush.msra.mxu0 0.0
    %247 = vmatpush.msra.mxu0 0.0
    %248 = vmatpush.msra.mxu0 0.0
    %249 = vmatpush.msra.mxu0 0.0
    %250 = vmatpush.msra.mxu0 0.0
    %251 = vmatpush.msra.mxu0 0.0
    %252 = vmatpush.msra.mxu0 0.0
    %253 = vmatpush.msra.mxu0 0.0
    %254 = vmatpush.msra.mxu0 0.0
    %255 = vmatpush.msra.mxu0 0.0
    %256 = vmatpush.msra.mxu0 0.0
    %257 = vmatpush.msra.mxu0 0.0
    %258 = vmatpush.msra.mxu0 0.0
    %259 = vmatpush.msra.mxu0 0.0
    %v260 = vand.u32 %v83, 4294901760
    %261 = vmatpush.msra.mxu0 %v260
    %v262 = vand.u32 %v82, 4294901760
    %263 = vmatpush.msra.mxu0 %v262
    %v264 = vand.u32 %v100, 4294901760
    %v265 = vsub.f32 %v100, %v264
    %v266 = vand.u32 %v265, 4294901760
    %267 = vmatmul.f32.gmra.mxu0 %v266
    %v268 = vpop.f32.mrf.mxu0
    %v269 = vadd.f32 %v229, %v268
    %v270 = vand.u32 %v103, 4294901760
    %v271 = vsub.f32 %v103, %v270
    %v272 = vand.u32 %v271, 4294901760
    %273 = vmatmul.f32.gmra.mxu0 %v272
    %v274 = vpop.f32.mrf.mxu0
    %v275 = vadd.f32 %v234, %v274
    %v276 = vand.u32 %v106, 4294901760
    %v277 = vsub.f32 %v106, %v276
    %v278 = vand.u32 %v277, 4294901760
    %279 = vmatmul.f32.gmra.mxu0 %v278
    %v280 = vpop.f32.mrf.mxu0
    %v281 = vadd.f32 %v239, %v280
    %v282 = vand.u32 %v109, 4294901760
    %v283 = vsub.f32 %v109, %v282
    %v284 = vand.u32 %v283, 4294901760
    %285 = vmatmul.f32.gmra.mxu0 %v284
    %v286 = vpop.f32.mrf.mxu0
    %v287 = vadd.f32 %v244, %v286
    %288 = vdwg.mxu0
    %289 = vmatpush.msra.mxu0 0.0
    %290 = vmatpush.msra.mxu0 0.0
    %291 = vmatpush.msra.mxu0 0.0
    %292 = vmatpush.msra.mxu0 0.0
    %293 = vmatpush.msra.mxu0 0.0
    %294 = vmatpush.msra.mxu0 0.0
    %295 = vmatpush.msra.mxu0 0.0
    %296 = vmatpush.msra.mxu0 0.0
    %297 = vmatpush.msra.mxu0 0.0
    %298 = vmatpush.msra.mxu0 0.0
    %299 = vmatpush.msra.mxu0 0.0
    %300 = vmatpush.msra.mxu0 0.0
    %301 = vmatpush.msra.mxu0 0.0
    %302 = vmatpush.msra.mxu0 0.0
    %v303 = vand.u32 %v83, 4294901760
    %v304 = vsub.f32 %v83, %v303
    %v305 = vand.u32 %v304, 4294901760
    %306 = vmatpush.msra.mxu0 %v305
    %v307 = vand.u32 %v82, 4294901760
    %v308 = vsub.f32 %v82, %v307
    %v309 = vand.u32 %v308, 4294901760
    %310 = vmatpush.msra.mxu0 %v309
    %v311 = vand.u32 %v100, 4294901760
    %312 = vmatmul.f32.gmra.mxu0 %v311
    %v313 = vpop.f32.mrf.mxu0
    %v314 = vadd.f32 %v269, %v313
    %v315 = vand.u32 %v103, 4294901760
    %316 = vmatmul.f32.gmra.mxu0 %v315
    %v317 = vpop.f32.mrf.mxu0
    %v318 = vadd.f32 %v275, %v317
    %v319 = vand.u32 %v106, 4294901760
    %320 = vmatmul.f32.gmra.mxu0 %v319
    %v321 = vpop.f32.mrf.mxu0
    %v322 = vadd.f32 %v281, %v321
    %v323 = vand.u32 %v109, 4294901760
    %324 = vmatmul.f32.gmra.mxu0 %v323
    %v325 = vpop.f32.mrf.mxu0
    %v326 = vadd.f32 %v287, %v325
    %327 = vdwg.mxu0
    %328 = vmatpush.msra.mxu0 0.0
    %329 = vmatpush.msra.mxu0 0.0
    %330 = vmatpush.msra.mxu0 0.0
    %331 = vmatpush.msra.mxu0 0.0
    %332 = vmatpush.msra.mxu0 0.0
    %333 = vmatpush.msra.mxu0 0.0
    %334 = vmatpush.msra.mxu0 0.0
    %335 = vmatpush.msra.mxu0 0.0
    %336 = vmatpush.msra.mxu0 0.0
    %337 = vmatpush.msra.mxu0 0.0
    %338 = vmatpush.msra.mxu0 0.0
    %339 = vmatpush.msra.mxu0 0.0
    %340 = vmatpush.msra.mxu0 0.0
    %341 = vmatpush.msra.mxu0 0.0
    %v342 = vand.u32 %v83, 4294901760
    %343 = vmatpush.msra.mxu0 %v342
    %v344 = vand.u32 %v82, 4294901760
    %345 = vmatpush.msra.mxu0 %v344
    %v346 = vand.u32 %v100, 4294901760
    %347 = vmatmul.f32.gmra.mxu0 %v346
    %v348 = vpop.f32.mrf.mxu0
    %v349 = vadd.f32 %v314, %v348
    %v350 = vand.u32 %v103, 4294901760
    %351 = vmatmul.f32.gmra.mxu0 %v350
    %v352 = vpop.f32.mrf.mxu0
    %v353 = vadd.f32 %v318, %v352
    %v354 = vand.u32 %v106, 4294901760
    %355 = vmatmul.f32.gmra.mxu0 %v354
    %v356 = vpop.f32.mrf.mxu0
    %v357 = vadd.f32 %v322, %v356
    %v358 = vand.u32 %v109, 4294901760
    %359 = vmatmul.f32.gmra.mxu0 %v358
    %v360 = vpop.f32.mrf.mxu0
    %v361 = vadd.f32 %v326, %v360
    %362 = vdwg.mxu0
    %363 = vst.msk [vmem:[#allocation7] sm:$0xff] %vm57, %v349
    %364 = vst.msk [vmem:[#allocation7 + $0x8] sm:$0xff] %vm57, %v353
    %365 = vst.msk [vmem:[#allocation7 + $0x10] sm:$0xff] %vm57, %v357
    %366 = vst.msk [vmem:[#allocation7 + $0x18] sm:$0xff] %vm57, %v361
    // Predicated region
    $region18: #{tpu_custom_call.1} parent=1 // pred_check
      _
    $region19: #{tpu_custom_call.1} parent=1 // pred_check_branch
      %368 = sbr.rel (0) target = $region21
    $region20: #{tpu_custom_call.1} parent=1 // pred_region
      %370 = vsyncadd [#allocation4], 0
      %s371 = sshll.u32 [#allocation7], 4
      %s372 = int_to_ptr.vmem [resolvable:$true] %s371
      %s373 = sshll.u32 %s2, 4
      %s374 = int_to_ptr.hbm [resolvable:$true] %s373
      %379 = dma.vmem_to_hbm [thread:$0]  %s372, 512, %s374, [#allocation4], 128, 128, 8
    $region21: #{tpu_custom_call.1} parent=1 // pred_fallthru
      _
    // Predicated region
    $region22: #{tpu_custom_call.1} parent=1 // pred_check
      _
    $region23: #{tpu_custom_call.1} parent=1 // pred_check_branch
      %381 = sbr.rel (0) target = $region25
    $region24: #{tpu_custom_call.1} parent=1 // pred_region
      %383 = dma.done [#allocation4], 512
    $region25: #{tpu_custom_call.1} parent=1 // pred_fallthru
      _
    %384 = vsyncpa [#allocation3], 1
    %385 = vsyncpa [#allocation6], 1
    %386 = vsyncpa [#allocation4], 1

</llo_original>
